<compile_context>
chip_gen: v7x
topology: tpu7x:2x2x1
jax: 0.10.0
libtpu: 0.0.40
codegen_flags: <defaults>
</compile_context>

<pallas_src>
import functools

import jax
import jax.numpy as jnp
from jax.experimental import pallas as pl
from jax.experimental.pallas import tpu as pltpu

_LANE = 512                       # lane-dense slab width (multiple of 128)
_ACC_ROWS = 8                     # accumulator sublane rows
_TARGET_TILE_BYTES = 4 * 1024 * 1024   # ~4 MiB block; x2 double-buffered < 16 MiB (v5e-safe)


def _round_up(x, m):
    return ((x + m - 1) // m) * m


def _motema_max_kernel(x_ref, o_ref, *, fold, acc_rows):
    """Streaming relu-max. o_ref (1, acc_rows, lane) is the resident partial-max block."""
    i = pl.program_id(1)

    @pl.when(i == 0)
    def _():
        # 0-init fuses the relu: max(0, x...) == max(relu(x)...).
        o_ref[...] = jnp.zeros_like(o_ref)

    x = x_ref[...]                                    # (tile_rows, lane), native dtype
    lane = x.shape[-1]
    # Fold the tile down to the accumulator shape with elementwise maxima only
    # (rides the 4 VPU slots; the single cross-lane reduce is deferred to the wrapper).
    folded = jnp.max(x.reshape(fold, acc_rows, lane), axis=0)
    o_ref[...] = jnp.maximum(o_ref[...], folded.astype(o_ref.dtype)[None])


def motema_forward(x, threshold, *, lane=_LANE, acc_rows=_ACC_ROWS,
                   target_tile_bytes=_TARGET_TILE_BYTES):
    """Pallas implementation of MotemaModel(threshold).forward(x) -> scalar bool."""
    if not jnp.issubdtype(x.dtype, jnp.floating):
        x = x.astype(jnp.float32)
    itemsize = jnp.dtype(x.dtype).itemsize

    flat = x.reshape(-1)
    total = flat.shape[0]

    # Lane-dense 2D slab: rows x lane.  Zero padding is safe: relu-max >= 0 and a
    # padded 0 can never raise it.
    rows = pl.cdiv(total, lane)

    max_tile_rows = max(acc_rows,
                        (target_tile_bytes // (lane * itemsize)) // acc_rows * acc_rows)
    tile_rows = min(max_tile_rows, _round_up(rows, acc_rows))

    # Shard the streaming read across TensorCores (v7x megacore) when big enough.
    n_shards = 2 if rows >= 2 * tile_rows else 1

    rows_padded = _round_up(rows, n_shards * tile_rows)
    pad = rows_padded * lane - total
    if pad:
        flat = jnp.pad(flat, (0, pad))            # zero pad
    x2 = flat.reshape(rows_padded, lane)

    n_steps = rows_padded // (n_shards * tile_rows)
    fold = tile_rows // acc_rows

    kernel = functools.partial(_motema_max_kernel, fold=fold, acc_rows=acc_rows)

    partial = pl.pallas_call(
        kernel,
        out_shape=jax.ShapeDtypeStruct((n_shards, acc_rows, lane), jnp.float32),
        grid_spec=pltpu.PrefetchScalarGridSpec(
            num_scalar_prefetch=0,
            grid=(n_shards, n_steps),
            in_specs=[pl.BlockSpec((tile_rows, lane),
                                   lambda s, i: (s * n_steps + i, 0))],
            out_specs=pl.BlockSpec((1, acc_rows, lane),
                                   lambda s, i: (s, 0, 0)),
        ),
        compiler_params=pltpu.CompilerParams(
            dimension_semantics=("parallel", "arbitrary"),
            vmem_limit_bytes=32 * 1024 * 1024,
        ),
    )(x2)

    # Tiny finalize outside the kernel: one cross-lane reduce over (n_shards, 8, lane)
    # + a scalar compare.  Threshold never enters the kernel (no per-threshold recompile).
    return jnp.max(partial) > jnp.asarray(threshold, jnp.float32)


def motema_reference(x, threshold):
    """Pure-JAX reference mirroring the PyTorch forward."""
    relu_output = jnp.maximum(x, 0.0)
    max_value = jnp.max(relu_output, axis=-1)
    return jnp.any(max_value > threshold)


if __name__ == "__main__":
    key = jax.random.PRNGKey(0)
    # Small NCHW-like input consistent with the module's generic forward.
    x = jax.random.normal(key, (2, 4, 16, 16), dtype=jnp.float32)

    threshold = 0.5
    result = jax.block_until_ready(motema_forward(x, threshold))
    expected = motema_reference(x, threshold)
    assert bool(result) == bool(expected), (bool(result), bool(expected))

    # Threshold so large the answer flips to False.
    big_threshold = 1e9
    result2 = jax.block_until_ready(motema_forward(x, big_threshold))
    expected2 = motema_reference(x, big_threshold)
    assert bool(result2) == bool(expected2), (bool(result2), bool(expected2))

    # Non-divisible shape: exercises zero-padding of the lane-dense slab.
    x_big = jax.random.normal(jax.random.PRNGKey(1), (3, 5, 37, 129), dtype=jnp.float32) - 2.0
    for t in (-0.5, 5.0):
        r = jax.block_until_ready(motema_forward(x_big, t))
        e = motema_reference(x_big, t)
        assert bool(r) == bool(e), (t, bool(r), bool(e))

    # Force small tiles to exercise the multi-step grid + 2-shard (megacore) path.
    for t in (-0.5, 5.0):
        r = jax.block_until_ready(
            motema_forward(x_big, t, target_tile_bytes=64 * 1024))
        e = motema_reference(x_big, t)
        assert bool(r) == bool(e), (t, bool(r), bool(e))

    print("KERNEL_OK")
</pallas_src>

<mosaic_0001>
module attributes {stable_mosaic.version = 11 : i64} {
  func.func @_motema_max_kernel(%arg0: i32, %arg1: i32, %arg2: memref<8x512xf32, #tpu.memory_space<vmem>>, %arg3: memref<1x8x512xf32, #tpu.memory_space<vmem>>) attributes {dimension_semantics = [#tpu.dimension_semantics<parallel>, #tpu.dimension_semantics<arbitrary>], iteration_bounds = array<i64: 1, 1>, scalar_prefetch = 0 : i64, scratch_operands = 0 : i64, tpu.core_type = #tpu.core_type<tc>, window_params = [{transform_indices = @transform_0, window_bounds = array<i64: 8, 512>}, {transform_indices = @transform_1, window_bounds = array<i64: 1, 8, 512>}]} {
    %c0_i32 = arith.constant 0 : i32
    %0 = arith.cmpi eq, %arg1, %c0_i32 : i32
    %1 = arith.extui %0 : i1 to i32
    %c0_i32_0 = arith.constant 0 : i32
    %2 = arith.cmpi ne, %1, %c0_i32_0 : i32
    scf.if %2 {
      %cst_8 = arith.constant 0.000000e+00 : f32
      %10 = vector.broadcast %cst_8 : f32 to vector<1x8x512xf32>
      %c0_9 = arith.constant 0 : index
      %c0_10 = arith.constant 0 : index
      %c0_11 = arith.constant 0 : index
      %11 = vector.load %arg3[%c0_9, %c0_10, %c0_11] : memref<1x8x512xf32, #tpu.memory_space<vmem>>, vector<1x8x512xf32>
      tpu.vector_store %arg3[%c0_9, %c0_10, %c0_11], %10 {strides = array<i32>} : memref<1x8x512xf32, #tpu.memory_space<vmem>>, vector<1x8x512xf32>,
    } else {
    }
    %c0 = arith.constant 0 : index
    %c0_1 = arith.constant 0 : index
    %3 = vector.load %arg2[%c0, %c0_1] : memref<8x512xf32, #tpu.memory_space<vmem>>, vector<8x512xf32>
    %4 = vector.shape_cast %3 : vector<8x512xf32> to vector<1x8x512xf32>
    %cst = arith.constant dense<0xFF800000> : vector<8x512xf32>
    %5 = vector.multi_reduction <maximumf>, %4, %cst [0] : vector<1x8x512xf32> to vector<8x512xf32>
    %c0_2 = arith.constant 0 : index
    %c0_3 = arith.constant 0 : index
    %c0_4 = arith.constant 0 : index
    %6 = vector.load %arg3[%c0_2, %c0_3, %c0_4] : memref<1x8x512xf32, #tpu.memory_space<vmem>>, vector<1x8x512xf32>
    %7 = vector.shape_cast %5 : vector<8x512xf32> to vector<1x8x512xf32>
    %8 = arith.maximumf %6, %7 : vector<1x8x512xf32>
    %c0_5 = arith.constant 0 : index
    %c0_6 = arith.constant 0 : index
    %c0_7 = arith.constant 0 : index
    %9 = vector.load %arg3[%c0_5, %c0_6, %c0_7] : memref<1x8x512xf32, #tpu.memory_space<vmem>>, vector<1x8x512xf32>
    tpu.vector_store %arg3[%c0_5, %c0_6, %c0_7], %8 {strides = array<i32>} : memref<1x8x512xf32, #tpu.memory_space<vmem>>, vector<1x8x512xf32>,
    return
  }
  func.func @transform_0(%arg0: i32, %arg1: i32) -> (i32, i32) {
    %c1_i32 = arith.constant 1 : i32
    %0 = arith.muli %arg0, %c1_i32 : i32
    %1 = arith.addi %0, %arg1 : i32
    %c0_i32 = arith.constant 0 : i32
    %c0_i32_0 = arith.constant 0 : i32
    return %1, %c0_i32 : i32, i32
  }
  func.func @transform_1(%arg0: i32, %arg1: i32) -> (i32, i32, i32) {
    %c0_i32 = arith.constant 0 : i32
    %c0_i32_0 = arith.constant 0 : i32
    %c0_i32_1 = arith.constant 0 : i32
    return %arg0, %c0_i32, %c0_i32_0 : i32, i32, i32
  }
}

</mosaic_0001>

<llo_original>
// kernel: tpu_custom_call.1
$region0: #{tpu_custom_call.1}
  #allocation0 [shape = 'u32[]', space=smem, size = 0x4, offset = 0x4, fixed_abs, tag = 'smem constant byte address 0x4 - core index']
  #allocation1 [shape = 'u32[144,128]{1,0:T(1,128)}', space=vmem, size = 0x12000, scoped, tag = 'internal scratch']
  %s0 = inlined_call_operand.hbm [shape: f32[8,512], index: 0, kind: input, shape index: {}]
  %s1 = inlined_call_operand.hbm [shape: f32[1,8,512], index: 1, kind: output, shape index: {}]
  %s2 = sld [smem:[#allocation0]]
  $region22: #{tpu_custom_call.1} parent=0
    _
  %s4 = ssub.s32 1, %s2
  %s5 = scalar_select 0, %s4, %s2
  $region1: #{tpu_custom_call.1} parent=0
    #allocation2 [shape = 'u8[16384]{0}', space=vmem, size = 0x4000, scoped, tag = 'input window, operand 0, single buffered']
    #allocation3 [shape = 's32[1]{0}', space=sflag, size = 0x4, scoped, tag = 'scoped memory for tpu_custom_call.1']
    #allocation4 [shape = 's32[1]{0}', space=sflag, size = 0x4, scoped, tag = 'scoped memory for tpu_custom_call.1']
    #allocation5 [shape = 'u8[16384]{0}', space=vmem, size = 0x4000, scoped, tag = 'output window, operand 0, single buffered']
    %6 = vsyncpa [#allocation3], 0
    %7 = vsyncpa [#allocation4], 0
    // Predicated region
    $region2: #{tpu_custom_call.1} parent=1 // pred_check
      _
    $region3: #{tpu_custom_call.1} parent=1 // pred_check_branch
      %9 = sbr.rel (0) target = $region5
    $region4: #{tpu_custom_call.1} parent=1 // pred_region
      %s10 = sadd.s32 0, 0
      %s12 = ssub.s32 512, 512
      %13 = vsyncadd [#allocation3], %s12
      %s14 = smul.addr %s10, 4
      %s15 = smul.addr %s14, 128
      %s16 = scalar_lea.hbm %s0, %s15
      %s18 = sshll.u32 [#allocation2], 4
      %s19 = int_to_ptr.vmem [resolvable:$true] %s18
      %21 = dma.hbm_to_vmem [thread:$0]  %s16, 512, %s19, [#allocation3]
    $region5: #{tpu_custom_call.1} parent=1 // pred_fallthru
      _
    // Predicated region
    $region6: #{tpu_custom_call.1} parent=1 // pred_check
      _
    $region7: #{tpu_custom_call.1} parent=1 // pred_check_branch
      %23 = sbr.rel (0) target = $region9
    $region8: #{tpu_custom_call.1} parent=1 // pred_region
      %24 = dma.done [#allocation3], 512
    $region9: #{tpu_custom_call.1} parent=1 // pred_fallthru
      _
    %s25 = sadd.s32 0, 0
    %p26 = scmp.eq.s32.totalorder 0, 0
    // Predicated region
    $region10: #{tpu_custom_call.1} parent=1 // pred_check
      %p27 = pneg %p26
    $region11: #{tpu_custom_call.1} parent=1 // pred_check_branch
      %29 = sbr.rel (%p27) target = $region13
    $region12: #{tpu_custom_call.1} parent=1 // pred_region
      %30 = vst [vmem:[#allocation5] sm:$0xff] 0.0
      %31 = vst [vmem:[#allocation5 + $0x8] sm:$0xff] 0.0
      %32 = vst [vmem:[#allocation5 + $0x10] sm:$0xff] 0.0
      %33 = vst [vmem:[#allocation5 + $0x18] sm:$0xff] 0.0
    $region13: #{tpu_custom_call.1} parent=1 // pred_fallthru
      _
    %v34 = vld [vmem:[#allocation2] sm:$0xff]
    %v35 = vld [vmem:[#allocation2 + $0x8] sm:$0xff]
    %v36 = vld [vmem:[#allocation2 + $0x10] sm:$0xff]
    %v37 = vld [vmem:[#allocation2 + $0x18] sm:$0xff]
    %v38 = vld [vmem:[#allocation5] sm:$0xff]
    %v39 = vld [vmem:[#allocation5 + $0x8] sm:$0xff]
    %v40 = vld [vmem:[#allocation5 + $0x10] sm:$0xff]
    %v41 = vld [vmem:[#allocation5 + $0x18] sm:$0xff]
    %v42 = vmax.f32 %v38, %v34
    %v43 = vmax.f32 %v39, %v35
    %v44 = vmax.f32 %v40, %v36
    %v45 = vmax.f32 %v41, %v37
    %46 = vst [vmem:[#allocation5] sm:$0xff] %v42
    %47 = vst [vmem:[#allocation5 + $0x8] sm:$0xff] %v43
    %48 = vst [vmem:[#allocation5 + $0x10] sm:$0xff] %v44
    %49 = vst [vmem:[#allocation5 + $0x18] sm:$0xff] %v45
    // Predicated region
    $region14: #{tpu_custom_call.1} parent=1 // pred_check
      _
    $region15: #{tpu_custom_call.1} parent=1 // pred_check_branch
      %51 = sbr.rel (0) target = $region17
    $region16: #{tpu_custom_call.1} parent=1 // pred_region
      %s53 = ssub.s32 512, 512
      %54 = vsyncadd [#allocation4], %s53
      %s56 = sshll.u32 [#allocation5], 4
      %s57 = int_to_ptr.vmem [resolvable:$true] %s56
      %59 = dma.vmem_to_hbm [thread:$0]  %s57, 512, %s1, [#allocation4]
    $region17: #{tpu_custom_call.1} parent=1 // pred_fallthru
      _
    // Predicated region
    $region18: #{tpu_custom_call.1} parent=1 // pred_check
      _
    $region19: #{tpu_custom_call.1} parent=1 // pred_check_branch
      %61 = sbr.rel (0) target = $region21
    $region20: #{tpu_custom_call.1} parent=1 // pred_region
      %62 = dma.done [#allocation4], 512
    $region21: #{tpu_custom_call.1} parent=1 // pred_fallthru
      _
    %63 = vsyncpa [#allocation3], 1
    %64 = vsyncpa [#allocation4], 1

</llo_original>
